<compile_context>
chip_gen: v7x
topology: tpu7x:2x2x1
jax: 0.10.0
libtpu: 0.0.40
codegen_flags: <defaults>
</compile_context>

<pallas_src>
import functools

import jax
import jax.numpy as jnp
from jax.experimental import pallas as pl
from jax.experimental.pallas import tpu as pltpu


_SUBLANE = 8
_LANE_WIDTH = 512                       # lane-dense column width (multiple of 128)
_TARGET_BLOCK_BYTES = 2 * 1024 * 1024   # ~2 MiB block; x4 (dbl-buffered in+out) = 8 MiB VMEM
_SINGLE_BLOCK_BYTES = 1 * 1024 * 1024   # below this, one block (grid-step overhead dominates)


def _round_up(a, b):
    return ((a + b - 1) // b) * b


# ---- kernel -----------------------------------------------------------------
def _custom_sigmoid_kernel(x_ref, o_ref, *, scale):
    # Elementwise: sigmoid's exp runs on the EUP, the scale + cast on the VPU;
    # one load + one store per tile, fully HBM-bound.
    x = x_ref[...].astype(jnp.float32)
    o_ref[...] = (scale * jax.nn.sigmoid(x)).astype(o_ref.dtype)


# ---- wrapper ----------------------------------------------------------------
def custom_sigmoid(x, beta=1.0):
    """out = x.shape[0] * sigmoid(x), matching CustomSigmoid.forward."""
    # TODO(synk): `beta` is accepted but unused, exactly as in the PyTorch
    # module's forward (it never references beta).
    orig_shape = x.shape
    scale = float(orig_shape[0])          # len(x) on a torch tensor == shape[0]

    n = 1
    for d in orig_shape:
        n *= int(d)
    dtype_bytes = jnp.dtype(x.dtype).itemsize
    total_bytes = n * dtype_bytes

    # Lane-dense slab: flatten everything and view it as (rows, 512).
    c = _LANE_WIDTH
    r = pl.cdiv(n, c)

    if total_bytes <= _SINGLE_BLOCK_BYTES:
        # Small array: one block.  Per-grid-step overhead (~0.35 us) would
        # rival the whole HBM transfer time at this size on v5e/v6e.
        tm = _round_up(r, _SUBLANE)
    else:
        # Big array: pick rows so one block is ~2 MiB (amortizes the per-step
        # overhead, ~85% of HBM roofline in measured sweeps), rounded to a
        # multiple of 8 sublanes.
        tm = max(_SUBLANE,
                 (_TARGET_BLOCK_BYTES // (c * dtype_bytes)) // _SUBLANE * _SUBLANE)
        # Guarantee >= 2 blocks so v7x's two TensorCores both get work.
        if pl.cdiv(r, tm) < 2:
            tm = max(_SUBLANE, _round_up(pl.cdiv(r, 2), _SUBLANE))

    r_pad = _round_up(r, tm)
    grid = (r_pad // tm,)

    x_flat = x.reshape(-1)
    pad = r_pad * c - n
    if pad:
        x_flat = jnp.pad(x_flat, (0, pad))
    x2 = x_flat.reshape(r_pad, c)

    kernel = functools.partial(_custom_sigmoid_kernel, scale=scale)

    out = pl.pallas_call(
        kernel,
        out_shape=jax.ShapeDtypeStruct((r_pad, c), x.dtype),
        grid=grid,
        in_specs=[pl.BlockSpec((tm, c), lambda i: (i, 0))],
        out_specs=pl.BlockSpec((tm, c), lambda i: (i, 0)),
        compiler_params=pltpu.CompilerParams(
            dimension_semantics=("parallel",)),
    )(x2)

    out_flat = out.reshape(-1)
    if pad:
        out_flat = out_flat[:n]
    return out_flat.reshape(orig_shape)


# ---- pure-JAX reference ------------------------------------------------------
def reference(x, beta=1.0):
    return x.shape[0] * jax.nn.sigmoid(x)


if __name__ == "__main__":
    key = jax.random.PRNGKey(0)
    k1, k2, k3 = jax.random.split(key, 3)

    # Small NCHW-style activation, the kind of tensor this module sees.
    x = jax.random.normal(k1, (2, 4, 16, 16), jnp.float32)
    out = jax.block_until_ready(custom_sigmoid(x))
    assert out.shape == x.shape
    assert jnp.allclose(out, reference(x), rtol=1e-5, atol=1e-5), "mismatch (nchw)"

    # Unaligned trailing dims: exercises the flatten + pad lane-dense path.
    x_un = jax.random.normal(k2, (6, 50), jnp.float32)
    out_un = jax.block_until_ready(custom_sigmoid(x_un))
    assert jnp.allclose(out_un, reference(x_un), rtol=1e-5, atol=1e-5), "mismatch (unaligned)"

    # Larger aligned shape (4 MiB): exercises the multi-block tiled path.
    x_big = jax.random.normal(k3, (512, 2048), jnp.float32)
    out_big = jax.block_until_ready(custom_sigmoid(x_big))
    assert jnp.allclose(out_big, reference(x_big), rtol=1e-5, atol=1e-5), "mismatch (big)"

    print("KERNEL_OK")
</pallas_src>

<mosaic_0001>
module attributes {stable_mosaic.version = 11 : i64} {
  func.func @_custom_sigmoid_kernel(%arg0: i32, %arg1: memref<8x512xf32, #tpu.memory_space<vmem>>, %arg2: memref<8x512xf32, #tpu.memory_space<vmem>>) attributes {dimension_semantics = [#tpu.dimension_semantics<parallel>], iteration_bounds = array<i64: 1>, scalar_prefetch = 0 : i64, scratch_operands = 0 : i64, tpu.core_type = #tpu.core_type<tc>, window_params = [{transform_indices = @transform_0, window_bounds = array<i64: 8, 512>}, {transform_indices = @transform_1, window_bounds = array<i64: 8, 512>}]} {
    %c0 = arith.constant 0 : index
    %c0_0 = arith.constant 0 : index
    %0 = vector.load %arg1[%c0, %c0_0] : memref<8x512xf32, #tpu.memory_space<vmem>>, vector<8x512xf32>
    %1 = arith.negf %0 : vector<8x512xf32>
    %2 = math.exp %1 : vector<8x512xf32>
    %cst = arith.constant 1.000000e+00 : f32
    %3 = vector.broadcast %cst : f32 to vector<8x512xf32>
    %4 = arith.addf %3, %2 : vector<8x512xf32>
    %5 = arith.divf %3, %4 : vector<8x512xf32>
    %cst_1 = arith.constant 2.000000e+00 : f32
    %6 = vector.broadcast %cst_1 : f32 to vector<8x512xf32>
    %7 = arith.mulf %6, %5 : vector<8x512xf32>
    %c0_2 = arith.constant 0 : index
    %c0_3 = arith.constant 0 : index
    %8 = vector.load %arg2[%c0_2, %c0_3] : memref<8x512xf32, #tpu.memory_space<vmem>>, vector<8x512xf32>
    tpu.vector_store %arg2[%c0_2, %c0_3], %7 {strides = array<i32>} : memref<8x512xf32, #tpu.memory_space<vmem>>, vector<8x512xf32>,
    return
  }
  func.func @transform_0(%arg0: i32) -> (i32, i32) {
    %c0_i32 = arith.constant 0 : i32
    %c0_i32_0 = arith.constant 0 : i32
    return %arg0, %c0_i32 : i32, i32
  }
  func.func @transform_1(%arg0: i32) -> (i32, i32) {
    %c0_i32 = arith.constant 0 : i32
    %c0_i32_0 = arith.constant 0 : i32
    return %arg0, %c0_i32 : i32, i32
  }
}

</mosaic_0001>

<llo_original>
// kernel: tpu_custom_call.1
$region0: #{tpu_custom_call.1}
  #allocation0 [shape = 'u32[]', space=smem, size = 0x4, offset = 0x4, fixed_abs, tag = 'smem constant byte address 0x4 - core index']
  #allocation1 [shape = 'u32[144,128]{1,0:T(1,128)}', space=vmem, size = 0x12000, scoped, tag = 'internal scratch']
  %s0 = inlined_call_operand.hbm [shape: f32[8,512], index: 0, kind: input, shape index: {}]
  %s1 = inlined_call_operand.hbm [shape: f32[8,512], index: 1, kind: output, shape index: {}]
  %s2 = sld [smem:[#allocation0]]
  $region18: #{tpu_custom_call.1} parent=0
    _
  %s4 = ssub.s32 1, %s2
  %s5 = scalar_select 0, %s4, %s2
  $region1: #{tpu_custom_call.1} parent=0
    #allocation2 [shape = 'u8[16384]{0}', space=vmem, size = 0x4000, scoped, tag = 'input window, operand 0, single buffered']
    #allocation3 [shape = 's32[1]{0}', space=sflag, size = 0x4, scoped, tag = 'scoped memory for tpu_custom_call.1']
    #allocation4 [shape = 's32[1]{0}', space=sflag, size = 0x4, scoped, tag = 'scoped memory for tpu_custom_call.1']
    #allocation5 [shape = 'u8[16384]{0}', space=vmem, size = 0x4000, scoped, tag = 'output window, operand 0, single buffered']
    %6 = vsyncpa [#allocation3], 0
    %7 = vsyncpa [#allocation4], 0
    // Predicated region
    $region2: #{tpu_custom_call.1} parent=1 // pred_check
      _
    $region3: #{tpu_custom_call.1} parent=1 // pred_check_branch
      %9 = sbr.rel (0) target = $region5
    $region4: #{tpu_custom_call.1} parent=1 // pred_region
      %s11 = ssub.s32 512, 512
      %12 = vsyncadd [#allocation3], %s11
      %s14 = sshll.u32 [#allocation2], 4
      %s15 = int_to_ptr.vmem [resolvable:$true] %s14
      %17 = dma.hbm_to_vmem [thread:$0]  %s0, 512, %s15, [#allocation3]
    $region5: #{tpu_custom_call.1} parent=1 // pred_fallthru
      _
    // Predicated region
    $region6: #{tpu_custom_call.1} parent=1 // pred_check
      _
    $region7: #{tpu_custom_call.1} parent=1 // pred_check_branch
      %19 = sbr.rel (0) target = $region9
    $region8: #{tpu_custom_call.1} parent=1 // pred_region
      %20 = dma.done [#allocation3], 512
    $region9: #{tpu_custom_call.1} parent=1 // pred_fallthru
      _
    %v21 = vld [vmem:[#allocation2] sm:$0xff]
    %v22 = vld [vmem:[#allocation2 + $0x8] sm:$0xff]
    %v23 = vld [vmem:[#allocation2 + $0x10] sm:$0xff]
    %v24 = vld [vmem:[#allocation2 + $0x18] sm:$0xff]
    %v25 = vxor.u32 %v21, 2147483648
    %v26 = vxor.u32 %v22, 2147483648
    %v27 = vxor.u32 %v23, 2147483648
    %v28 = vxor.u32 %v24, 2147483648
    %v29 = vmul.f32 %v25, 1.442695
    %v30 = vpow.pop %v29
    %v31 = vmul.f32 %v26, 1.442695
    %v32 = vpow.pop %v31
    %v33 = vmul.f32 %v27, 1.442695
    %v34 = vpow.pop %v33
    %v35 = vmul.f32 %v28, 1.442695
    %v36 = vpow.pop %v35
    %v37 = vadd.f32 %v30, 1.0
    %v38 = vadd.f32 %v32, 1.0
    %v39 = vadd.f32 %v34, 1.0
    %v40 = vadd.f32 %v36, 1.0
    %v41 = vrcp.pop %v37
    %v42 = vmul.f32 1.0, %v41
    %v43 = vrcp.pop %v38
    %v44 = vmul.f32 1.0, %v43
    %v45 = vrcp.pop %v39
    %v46 = vmul.f32 1.0, %v45
    %v47 = vrcp.pop %v40
    %v48 = vmul.f32 1.0, %v47
    %v49 = vmul.f32 %v42, 2.0
    %v50 = vmul.f32 %v44, 2.0
    %v51 = vmul.f32 %v46, 2.0
    %v52 = vmul.f32 %v48, 2.0
    %53 = vst [vmem:[#allocation5] sm:$0xff] %v49
    %54 = vst [vmem:[#allocation5 + $0x8] sm:$0xff] %v50
    %55 = vst [vmem:[#allocation5 + $0x10] sm:$0xff] %v51
    %56 = vst [vmem:[#allocation5 + $0x18] sm:$0xff] %v52
    // Predicated region
    $region10: #{tpu_custom_call.1} parent=1 // pred_check
      _
    $region11: #{tpu_custom_call.1} parent=1 // pred_check_branch
      %58 = sbr.rel (0) target = $region13
    $region12: #{tpu_custom_call.1} parent=1 // pred_region
      %s60 = ssub.s32 512, 512
      %61 = vsyncadd [#allocation4], %s60
      %s63 = sshll.u32 [#allocation5], 4
      %s64 = int_to_ptr.vmem [resolvable:$true] %s63
      %66 = dma.vmem_to_hbm [thread:$0]  %s64, 512, %s1, [#allocation4]
    $region13: #{tpu_custom_call.1} parent=1 // pred_fallthru
      _
    // Predicated region
    $region14: #{tpu_custom_call.1} parent=1 // pred_check
      _
    $region15: #{tpu_custom_call.1} parent=1 // pred_check_branch
      %68 = sbr.rel (0) target = $region17
    $region16: #{tpu_custom_call.1} parent=1 // pred_region
      %69 = dma.done [#allocation4], 512
    $region17: #{tpu_custom_call.1} parent=1 // pred_fallthru
      _
    %70 = vsyncpa [#allocation3], 1
    %71 = vsyncpa [#allocation4], 1

</llo_original>
